<compile_context>
chip_gen: v5e
topology: v5e:2x2
jax: 0.10.0
libtpu: 0.0.40
codegen_flags: <defaults>
</compile_context>

<pallas_src>
import functools

import jax
import jax.numpy as jnp
from jax.experimental import pallas as pl
from jax.experimental.pallas import tpu as pltpu

LANE = 128     # vreg lane width
SUBLANE = 8    # f32 sublane width


def _round_up(n, m):
    return ((n + m - 1) // m) * m


def _make_kernel(out_dim):
    """Kernel refs: x[TB,P] bf16, W[P,P] bf16, b[1,P] f32 -> q[TB,P] f32, act[TB,1] i32."""
    def kernel(x_ref, w_ref, b_ref, q_ref, act_ref):
        # One native bf16 MXU push, f32 accumulation, f32 bias add.
        q = jnp.dot(x_ref[...], w_ref[...], preferred_element_type=jnp.float32)
        q = q + b_ref[...]
        q_ref[...] = q
        # Fused greedy-action argmax over the real output lanes only
        # (padded lanes are exactly zero, so mask them out with -inf).
        lane = jax.lax.broadcasted_iota(jnp.int32, q.shape, 1)
        q_valid = jnp.where(lane < out_dim, q, -jnp.inf)
        m = jnp.max(q_valid, axis=-1, keepdims=True)
        idx = jnp.min(jnp.where(q_valid == m, lane, jnp.int32(q.shape[-1])),
                      axis=-1, keepdims=True)
        act_ref[...] = idx
    return kernel


def pack_params(params):
    """Collapse the activation-free Linear stack into one affine map, pad to 128.

    params: list of (W [in, out], b [out]) — i.e. PyTorch Linear.weight.T, bias.
    Padded W rows/cols and padded bias lanes are zero, so nothing leaks into the
    real output lanes.  Call once; reuse every step.
    Returns (w_slab bf16 [P,P], b_slab f32 [1,P], in_dim, out_dim).
    """
    w_eff = params[0][0].astype(jnp.float32)
    b_eff = params[0][1].astype(jnp.float32)
    for w, b in params[1:]:
        w = w.astype(jnp.float32)
        b = b.astype(jnp.float32)
        w_eff = w_eff @ w
        b_eff = b_eff @ w + b
    in_dim, out_dim = w_eff.shape

    P = _round_up(max(in_dim, out_dim, LANE), LANE)
    w_slab = jnp.zeros((P, P), jnp.float32).at[:in_dim, :out_dim].set(w_eff)
    w_slab = w_slab.astype(jnp.bfloat16)      # halves weight DMA; MXU accumulates f32
    b_slab = jnp.zeros((1, P), jnp.float32).at[0, :out_dim].set(b_eff)
    return w_slab, b_slab, in_dim, out_dim


@functools.partial(jax.jit, static_argnames=("out_dim",))
def neural_net_forward(x, w_slab, b_slab, *, out_dim):
    """Fused forward: returns (q [batch, out_dim] f32, greedy_action [batch] int32)."""
    batch, in_dim = x.shape
    P = w_slab.shape[-1]

    # Batch tiling: one grid step for act()-sized batches; 256-row parallel tiles
    # for replay-sized batches so v7x (2 TCs) can shard the batch axis.
    tb = 256 if batch >= 512 else _round_up(batch, SUBLANE)
    pb = _round_up(batch, tb)

    # Lane-dense, sublane-aligned bf16 input (this pad fuses into the same jit).
    x_pad = jnp.zeros((pb, P), jnp.bfloat16)
    x_pad = x_pad.at[:batch, :in_dim].set(x.astype(jnp.bfloat16))

    q_pad, act_pad = pl.pallas_call(
        _make_kernel(out_dim),
        out_shape=(jax.ShapeDtypeStruct((pb, P), jnp.float32),
                   jax.ShapeDtypeStruct((pb, 1), jnp.int32)),
        grid=(pb // tb,),
        in_specs=[pl.BlockSpec((tb, P), lambda i: (i, 0)),
                  pl.BlockSpec((P, P), lambda i: (0, 0)),   # weight stays VMEM-resident
                  pl.BlockSpec((1, P), lambda i: (0, 0))],  # bias stays VMEM-resident
        out_specs=(pl.BlockSpec((tb, P), lambda i: (i, 0)),
                   pl.BlockSpec((tb, 1), lambda i: (i, 0))),
        compiler_params=pltpu.CompilerParams(dimension_semantics=("parallel",)),
    )(x_pad, w_slab, b_slab)

    # Strip padding (fused into this jit; kernel stores stay lane-dense).
    return q_pad[:batch, :out_dim], act_pad[:batch, 0]


def init_params(layers, key):
    """Deterministic init mimicking PyTorch nn.Linear (uniform +/- 1/sqrt(fan_in))."""
    params = []
    for i in range(len(layers) - 1):
        fan_in, fan_out = layers[i], layers[i + 1]
        key, kw, kb = jax.random.split(key, 3)
        bound = 1.0 / (fan_in ** 0.5)
        w = jax.random.uniform(kw, (fan_in, fan_out), jnp.float32, -bound, bound)
        b = jax.random.uniform(kb, (fan_out,), jnp.float32, -bound, bound)
        params.append((w, b))
    return params


def reference_forward(x, params):
    y = x
    for w, b in params:
        y = y @ w + b
    return y


def _check(x, params, w_slab, b_slab, out_dim):
    q, act = neural_net_forward(x, w_slab, b_slab, out_dim=out_dim)
    q = jax.block_until_ready(q)
    act = jax.block_until_ready(act)

    ref = reference_forward(x, params)
    assert q.shape == (x.shape[0], out_dim)
    assert jnp.allclose(q, ref, atol=1e-2, rtol=1e-2), "Q mismatch vs. reference"

    # Greedy-action check only where the reference top-2 Q gap is well above the
    # bf16 error floor (ties/near-ties are legitimately order-sensitive).
    ref_sorted = jnp.sort(ref, axis=-1)
    gap = ref_sorted[:, -1] - ref_sorted[:, -2]
    ref_act = jnp.argmax(ref, axis=-1)
    ok = jnp.where(gap > 5e-2, act == ref_act, True)
    assert bool(jnp.all(ok)), "greedy action mismatch vs. reference"


if __name__ == "__main__":
    # Cart-pole DQN sized network: 4 observations -> 2 actions, two hidden layers.
    layers = [4, 64, 64, 2]

    key = jax.random.PRNGKey(0)
    key, kx_small, kx_big = jax.random.split(key, 3)
    params = init_params(layers, key)

    # Collapse + pad + pack once, outside the hot loop.
    w_slab, b_slab, in_dim, out_dim = pack_params(params)

    # act()-sized batch: single grid step, no-grid-overhead path.
    x_small = jax.random.normal(kx_small, (8, layers[0]), jnp.float32)
    _check(x_small, params, w_slab, b_slab, out_dim)

    # replay-sized batch: exercises the 256-row parallel batch grid (v7x megacore).
    x_big = jax.random.normal(kx_big, (1024, layers[0]), jnp.float32)
    _check(x_big, params, w_slab, b_slab, out_dim)

    print("KERNEL_OK")
</pallas_src>

<mosaic_0001>
module attributes {stable_mosaic.version = 11 : i64} {
  func.func @kernel(%arg0: i32, %arg1: memref<8x128xbf16, #tpu.memory_space<vmem>>, %arg2: memref<128x128xbf16, #tpu.memory_space<vmem>>, %arg3: memref<1x128xf32, #tpu.memory_space<vmem>>, %arg4: memref<8x128xf32, #tpu.memory_space<vmem>>, %arg5: memref<8x1xi32, #tpu.memory_space<vmem>>) attributes {dimension_semantics = [#tpu.dimension_semantics<parallel>], iteration_bounds = array<i64: 1>, scalar_prefetch = 0 : i64, scratch_operands = 0 : i64, tpu.core_type = #tpu.core_type<tc>, window_params = [{transform_indices = @transform_0, window_bounds = array<i64: 8, 128>}, {pipeline_mode = #tpu.pipeline_mode<synchronous>, transform_indices = @transform_1, window_bounds = array<i64: 128, 128>}, {pipeline_mode = #tpu.pipeline_mode<synchronous>, transform_indices = @transform_2, window_bounds = array<i64: 1, 128>}, {transform_indices = @transform_3, window_bounds = array<i64: 8, 128>}, {transform_indices = @transform_4, window_bounds = array<i64: 8, 1>}]} {
    %c0 = arith.constant 0 : index
    %c0_0 = arith.constant 0 : index
    %0 = vector.load %arg1[%c0, %c0_0] : memref<8x128xbf16, #tpu.memory_space<vmem>>, vector<8x128xbf16>
    %c0_1 = arith.constant 0 : index
    %c0_2 = arith.constant 0 : index
    %1 = vector.load %arg2[%c0_1, %c0_2] : memref<128x128xbf16, #tpu.memory_space<vmem>>, vector<128x128xbf16>
    %cst = arith.constant dense<0.000000e+00> : vector<8x128xf32>
    %2 = tpu.matmul %0, %1, %cst {dimension_numbers = #tpu.dot_dimension_numbers<[1], [0], [0], [1], [0, 0, 1, 1], [], []>} : vector<8x128xbf16>, vector<128x128xbf16>, vector<8x128xf32> -> vector<8x128xf32>
    %c0_3 = arith.constant 0 : index
    %c0_4 = arith.constant 0 : index
    %3 = vector.load %arg3[%c0_3, %c0_4] : memref<1x128xf32, #tpu.memory_space<vmem>>, vector<1x128xf32>
    %4 = vector.broadcast %3 : vector<1x128xf32> to vector<8x128xf32>
    %5 = arith.addf %2, %4 : vector<8x128xf32>
    %c0_5 = arith.constant 0 : index
    %c0_6 = arith.constant 0 : index
    %6 = vector.load %arg4[%c0_5, %c0_6] : memref<8x128xf32, #tpu.memory_space<vmem>>, vector<8x128xf32>
    tpu.vector_store %arg4[%c0_5, %c0_6], %5 {strides = array<i32>} : memref<8x128xf32, #tpu.memory_space<vmem>>, vector<8x128xf32>,
    %7 = tpu.iota {dimensions = array<i32: 1>} : vector<8x128xi32>
    %c2_i32 = arith.constant 2 : i32
    %8 = vector.broadcast %c2_i32 : i32 to vector<8x128xi32>
    %9 = arith.cmpi slt, %7, %8 : vector<8x128xi32>
    %cst_7 = arith.constant 0xFF800000 : f32
    %10 = vector.broadcast %cst_7 : f32 to vector<8x128xf32>
    %11 = arith.select %9, %5, %10 : vector<8x128xi1>, vector<8x128xf32>
    %cst_8 = arith.constant dense<0xFF800000> : vector<8xf32>
    %12 = vector.multi_reduction <maximumf>, %11, %cst_8 [1] : vector<8x128xf32> to vector<8xf32>
    %13 = vector.shape_cast %12 : vector<8xf32> to vector<8x1xf32>
    %14 = vector.broadcast %13 : vector<8x1xf32> to vector<8x128xf32>
    %15 = arith.cmpf oeq, %11, %14 : vector<8x128xf32>
    %c128_i32 = arith.constant 128 : i32
    %16 = vector.broadcast %c128_i32 : i32 to vector<8x128xi32>
    %17 = arith.select %15, %7, %16 : vector<8x128xi1>, vector<8x128xi32>
    %cst_9 = arith.constant dense<2147483647> : vector<8xi32>
    %18 = vector.multi_reduction <minsi>, %17, %cst_9 [1] : vector<8x128xi32> to vector<8xi32>
    %19 = vector.shape_cast %18 : vector<8xi32> to vector<8x1xi32>
    %c0_10 = arith.constant 0 : index
    %c0_11 = arith.constant 0 : index
    %20 = vector.load %arg5[%c0_10, %c0_11] : memref<8x1xi32, #tpu.memory_space<vmem>>, vector<8x1xi32>
    tpu.vector_store %arg5[%c0_10, %c0_11], %19 {strides = array<i32>} : memref<8x1xi32, #tpu.memory_space<vmem>>, vector<8x1xi32>,
    return
  }
  func.func @transform_0(%arg0: i32) -> (i32, i32) {
    %c0_i32 = arith.constant 0 : i32
    %c0_i32_0 = arith.constant 0 : i32
    return %arg0, %c0_i32 : i32, i32
  }
  func.func @transform_1(%arg0: i32) -> (i32, i32) {
    %c0_i32 = arith.constant 0 : i32
    %c0_i32_0 = arith.constant 0 : i32
    %c0_i32_1 = arith.constant 0 : i32
    return %c0_i32, %c0_i32_0 : i32, i32
  }
  func.func @transform_2(%arg0: i32) -> (i32, i32) {
    %c0_i32 = arith.constant 0 : i32
    %c0_i32_0 = arith.constant 0 : i32
    %c0_i32_1 = arith.constant 0 : i32
    return %c0_i32, %c0_i32_0 : i32, i32
  }
  func.func @transform_3(%arg0: i32) -> (i32, i32) {
    %c0_i32 = arith.constant 0 : i32
    %c0_i32_0 = arith.constant 0 : i32
    return %arg0, %c0_i32 : i32, i32
  }
  func.func @transform_4(%arg0: i32) -> (i32, i32) {
    %c0_i32 = arith.constant 0 : i32
    %c0_i32_0 = arith.constant 0 : i32
    return %arg0, %c0_i32 : i32, i32
  }
}

</mosaic_0001>

<llo_original>
// kernel: neural_net_forward.1
$region0: #{neural_net_forward.1}
  #allocation0 [shape = 'u32[]', space=smem, size = 0x4, offset = 0x4, fixed_abs, tag = 'smem constant byte address 0x4 - core index']
  #allocation1 [shape = 'u32[72,128]{1,0:T(1,128)}', space=vmem, size = 0x9000, scoped, tag = 'internal scratch']
  %s0 = inlined_call_operand.vmem [shape: bf16[8,128], index: 0, kind: input, shape index: {}]
  %s1 = inlined_call_operand.hbm [shape: bf16[128,128], index: 1, kind: input, shape index: {}]
  %s2 = inlined_call_operand.vmem [shape: f32[1,128], index: 2, kind: input, shape index: {}]
  %s3 = inlined_call_operand.vmem [shape: f32[8,128], index: 3, kind: output, shape index: {0}]
  %s4 = inlined_call_operand.vmem [shape: s32[8,1], index: 4, kind: output, shape index: {1}]
  %5 = xla_tuple %s3, %s4
  %s6 = sld [smem:[#allocation0]]
  $region34: #{neural_net_forward.1} parent=0
    _
  %s8 = ssub.s32 1, %s6
  %s9 = scalar_select 0, %s8, %s6
  $region1: #{neural_net_forward.1} parent=0
    #allocation2 [shape = 'u8[32768]{0}', space=vmem, size = 0x8000, scoped, tag = 'input window, operand 1, single buffered']
    #allocation3 [shape = 's32[1]{0}', space=sflag, size = 0x4, scoped, tag = 'scoped memory for neural_net_forward.1']
    %10 = vsyncpa [#allocation3], 0
    // Predicated region
    $region2: #{neural_net_forward.1} parent=1 // pred_check
      _
    $region3: #{neural_net_forward.1} parent=1 // pred_check_branch
      %12 = sbr.rel (0) target = $region5
    $region4: #{neural_net_forward.1} parent=1 // pred_region
      _
    $region5: #{neural_net_forward.1} parent=1 // pred_fallthru
      _
    // Predicated region
    $region6: #{neural_net_forward.1} parent=1 // pred_check
      _
    $region7: #{neural_net_forward.1} parent=1 // pred_check_branch
      %14 = sbr.rel (0) target = $region9
    $region8: #{neural_net_forward.1} parent=1 // pred_region
      %16 = vsyncadd [#allocation3], 0
      %s17 = sshll.u32 %s1, 4
      %s18 = int_to_ptr.hbm [resolvable:$true] %s17
      %s19 = sshll.u32 [#allocation2], 4
      %s20 = int_to_ptr.vmem [resolvable:$true] %s19
      %25 = dma.hbm_to_vmem [thread:$0]  %s18, 1024, %s20, [#allocation3], 64, 64, 4
    $region9: #{neural_net_forward.1} parent=1 // pred_fallthru
      _
    // Predicated region
    $region10: #{neural_net_forward.1} parent=1 // pred_check
      _
    $region11: #{neural_net_forward.1} parent=1 // pred_check_branch
      %27 = sbr.rel (0) target = $region13
    $region12: #{neural_net_forward.1} parent=1 // pred_region
      _
    $region13: #{neural_net_forward.1} parent=1 // pred_fallthru
      _
    // Predicated region
    $region14: #{neural_net_forward.1} parent=1 // pred_check
      _
    $region15: #{neural_net_forward.1} parent=1 // pred_check_branch
      %29 = sbr.rel (0) target = $region17
    $region16: #{neural_net_forward.1} parent=1 // pred_region
      %31 = dma.done [#allocation3], 1024
    $region17: #{neural_net_forward.1} parent=1 // pred_fallthru
      _
    %v32 = vld [vmem:[%s0] sm:$0xf]
    %v33 = vld [vmem:[#allocation2] sm:$0xf]
    %v34 = vld [vmem:[#allocation2 + $0x4] sm:$0xf]
    %v35 = vld [vmem:[#allocation2 + $0x8] sm:$0xf]
    %v36 = vld [vmem:[#allocation2 + $0xc] sm:$0xf]
    %v37 = vld [vmem:[#allocation2 + $0x10] sm:$0xf]
    %v38 = vld [vmem:[#allocation2 + $0x14] sm:$0xf]
    %v39 = vld [vmem:[#allocation2 + $0x18] sm:$0xf]
    %v40 = vld [vmem:[#allocation2 + $0x1c] sm:$0xf]
    %v41 = vld [vmem:[#allocation2 + $0x20] sm:$0xf]
    %v42 = vld [vmem:[#allocation2 + $0x24] sm:$0xf]
    %v43 = vld [vmem:[#allocation2 + $0x28] sm:$0xf]
    %v44 = vld [vmem:[#allocation2 + $0x2c] sm:$0xf]
    %v45 = vld [vmem:[#allocation2 + $0x30] sm:$0xf]
    %v46 = vld [vmem:[#allocation2 + $0x34] sm:$0xf]
    %v47 = vld [vmem:[#allocation2 + $0x38] sm:$0xf]
    %v48 = vld [vmem:[#allocation2 + $0x3c] sm:$0xf]
    %v49 = vld [vmem:[%s2] sm:$0x1]
    %v51 = vperm.slane %v49, 0
    %v69 = vunpack.c.l.b16 %v33
    %v70 = vunpack.c.l.b16 %v34
    %v71 = vunpack.c.l.b16 %v35
    %v72 = vunpack.c.l.b16 %v36
    %v73 = vunpack.c.l.b16 %v37
    %v74 = vunpack.c.l.b16 %v38
    %v75 = vunpack.c.l.b16 %v39
    %v76 = vunpack.c.l.b16 %v40
    %v77 = vunpack.c.l.b16 %v41
    %v78 = vunpack.c.l.b16 %v42
    %v79 = vunpack.c.l.b16 %v43
    %v80 = vunpack.c.l.b16 %v44
    %v81 = vunpack.c.l.b16 %v45
    %v82 = vunpack.c.l.b16 %v46
    %v83 = vunpack.c.l.b16 %v47
    %v84 = vunpack.c.l.b16 %v48
    %v85 = vpack.c.b16 %v70, %v69
    %v86 = vpack.c.b16 %v72, %v71
    %v87 = vpack.c.b16 %v74, %v73
    %v88 = vpack.c.b16 %v76, %v75
    %v89 = vpack.c.b16 %v78, %v77
    %v90 = vpack.c.b16 %v80, %v79
    %v91 = vpack.c.b16 %v82, %v81
    %v92 = vpack.c.b16 %v84, %v83
    %101 = vmatpush.bf16.msra.mxu0 %v92
    %102 = vmatpush.bf16.msra.mxu0 %v91
    %103 = vmatpush.bf16.msra.mxu0 %v90
    %104 = vmatpush.bf16.msra.mxu0 %v89
    %105 = vmatpush.bf16.msra.mxu0 %v88
    %106 = vmatpush.bf16.msra.mxu0 %v87
    %107 = vmatpush.bf16.msra.mxu0 %v86
    %108 = vmatpush.bf16.msra.mxu0 %v85
    %109 = vmatmul.bf16.gmra.mxu0 %v32
    %v110 = vpop.f32.mrf.mxu0
    %v111 = vadd.f32 %v51, %v110
    %v112 = vpop.f32.mrf.mxu0
    %113 = vdwg.mxu0
    %114 = vst [vmem:[%s3] sm:$0xff] %v111
    %v115 = vlaneseq
    %v116 = vand.u32 %v115, 127
    %vm117 = vcmp.lt.s32.totalorder %v116, 2
    %v118 = vsel %vm117, %v111, -inf
    %119 = vmax.xlane.f32.xlu0 %v118
    %v120 = vpop.xlane.xlu0 %119
    %vm121 = vcmp.eq.f32.partialorder %v118, %v120
    %v122 = vsel %vm121, %v116, 128
    %v123 = vand.u32 %v122, 65535
    %v124 = vshra.s32 %v122, 16
    %v125 = vcvt.s32.f32 %v123
    %v126 = vcvt.s32.f32 %v124
    %127 = vmin.xlane.f32.xlu0 %v126
    %v128 = vpop.xlane.xlu0 %127
    %vm129 = vcmp.eq.f32.partialorder %v126, %v128
    %v130 = vsel %vm129, %v125, inf
    %131 = vmin.xlane.f32.xlu0 %v130
    %v132 = vpop.xlane.xlu0 %131
    %v133 = vcvt.f32.s32 %v132
    %v134 = vcvt.f32.s32 %v128
    %v135 = vshll.u32 %v134, 16
    %v136 = vadd.s32 %v135, %v133
    %vm137 = vcmask 7168
    %138 = vst.msk [vmem:[%s4] sm:$0xff] %vm137, %v136
    // Predicated region
    $region18: #{neural_net_forward.1} parent=1 // pred_check
      _
    $region19: #{neural_net_forward.1} parent=1 // pred_check_branch
      %140 = sbr.rel (0) target = $region21
    $region20: #{neural_net_forward.1} parent=1 // pred_region
      _
    $region21: #{neural_net_forward.1} parent=1 // pred_fallthru
      _
    // Predicated region
    $region22: #{neural_net_forward.1} parent=1 // pred_check
      _
    $region23: #{neural_net_forward.1} parent=1 // pred_check_branch
      %142 = sbr.rel (0) target = $region25
    $region24: #{neural_net_forward.1} parent=1 // pred_region
      _
    $region25: #{neural_net_forward.1} parent=1 // pred_fallthru
      _
    // Predicated region
    $region26: #{neural_net_forward.1} parent=1 // pred_check
      _
    $region27: #{neural_net_forward.1} parent=1 // pred_check_branch
      %144 = sbr.rel (0) target = $region29
    $region28: #{neural_net_forward.1} parent=1 // pred_region
      _
    $region29: #{neural_net_forward.1} parent=1 // pred_fallthru
      _
    // Predicated region
    $region30: #{neural_net_forward.1} parent=1 // pred_check
      _
    $region31: #{neural_net_forward.1} parent=1 // pred_check_branch
      %146 = sbr.rel (0) target = $region33
    $region32: #{neural_net_forward.1} parent=1 // pred_region
      _
    $region33: #{neural_net_forward.1} parent=1 // pred_fallthru
      _
    %147 = vsyncpa [#allocation3], 1

</llo_original>
